<compile_context>
chip_gen: v5e
topology: v5e:2x2
jax: 0.10.0
libtpu: 0.0.40
codegen_flags: <defaults>
</compile_context>

<pallas_src>
import jax
import jax.numpy as jnp
from jax import lax
from jax.experimental import pallas as pl
from jax.experimental.pallas import tpu as pltpu


def _embedding_onehot_kernel(idx_ref, table_ref, out_ref):
    """Gather `rows` embedding rows via a one-hot matmul on the MXU.

    idx_ref   : (rows, 1) int32   -- indices for this output tile
    table_ref : (vocab, dim)      -- full embedding table, VMEM-resident
    out_ref   : (rows, dim)       -- lane/sublane-dense output tile
    """
    vocab = table_ref.shape[0]
    rows = idx_ref.shape[0]
    idx = jnp.clip(idx_ref[...], 0, vocab - 1)                  # (rows, 1)
    col = lax.broadcasted_iota(jnp.int32, (rows, vocab), 1)     # (rows, vocab)
    one_hot = (col == idx).astype(table_ref.dtype)              # (rows, vocab)
    out_ref[...] = jnp.dot(
        one_hot, table_ref[...], preferred_element_type=jnp.float32
    ).astype(out_ref.dtype)


def group_embedding_lookup(table, num_group, *, max_tile=512):
    """Pallas equivalent of GroupEmbeddingLayer.forward (nn.Embedding lookup)."""
    vocab, dim = table.shape
    flat_idx = num_group.reshape(-1).astype(jnp.int32)
    n = flat_idx.shape[0]

    # Adaptive row tile: one full block for small inputs (minimal padding,
    # single grid step), max_tile-row blocks for large inputs (amortize the
    # per-grid-step overhead with big, lane/sublane-dense tiles).
    n8 = ((n + 7) // 8) * 8
    tile = n8 if n8 <= max_tile else max_tile
    num_tiles = pl.cdiv(n, tile)
    n_pad = num_tiles * tile
    idx2d = jnp.pad(flat_idx, (0, n_pad - n)).reshape(n_pad, 1)

    # VMEM budget: table (single-buffered, constant index_map) + double-buffered
    # index & output tiles + one-hot / matmul staging slack. Capped at 64 MiB so
    # it also fits v7x physical VMEM.
    itemsize = jnp.dtype(table.dtype).itemsize
    vmem_bytes = (
        vocab * dim * itemsize
        + 2 * tile * 128 * 4
        + 2 * tile * dim * itemsize
        + 2 * tile * max(vocab, 128) * 4
    )
    vmem_bytes = int(min(max(2 * vmem_bytes, 4 << 20), 64 << 20))

    out_flat = pl.pallas_call(
        _embedding_onehot_kernel,
        out_shape=jax.ShapeDtypeStruct((n_pad, dim), table.dtype),
        grid_spec=pltpu.PrefetchScalarGridSpec(
            num_scalar_prefetch=0,
            grid=(num_tiles,),
            in_specs=[
                # Index tile for this output block: (tile, 1), sublane-dense.
                pl.BlockSpec((tile, 1), lambda i: (i, 0)),
                # Whole table as one block; constant index_map => fetched once.
                pl.BlockSpec((vocab, dim), lambda i: (0, 0)),
            ],
            out_specs=pl.BlockSpec((tile, dim), lambda i: (i, 0)),
        ),
        compiler_params=pltpu.CompilerParams(
            dimension_semantics=("parallel",),
            vmem_limit_bytes=vmem_bytes,
        ),
    )(idx2d, table)

    return out_flat[:n].reshape(num_group.shape + (dim,))


if __name__ == "__main__":
    # Deterministic synthetic parameters / inputs (no checkpoint loading).
    number_group = 64      # vocabulary size of the group embedding
    embedding_dim = 128    # lane-dense embedding width
    batch, seq = 2, 8

    key = jax.random.PRNGKey(0)
    k_table, k_idx = jax.random.split(key)

    # nn.Embedding default init ~ N(0, 1); reproduce that deterministically.
    table = jax.random.normal(
        k_table, (number_group, embedding_dim), dtype=jnp.float32
    )
    num_group = jax.random.randint(
        k_idx, (batch, seq), 0, number_group, dtype=jnp.int32
    )

    out = group_embedding_lookup(table, num_group)
    out = jax.block_until_ready(out)

    # Reference check against a plain JAX gather (same semantics as torch).
    ref = jnp.take(table, num_group, axis=0)
    assert out.shape == (batch, seq, embedding_dim)
    assert jnp.allclose(out, ref), "Pallas embedding lookup mismatch"

    print("KERNEL_OK")
</pallas_src>

<mosaic_0001>
module attributes {stable_mosaic.version = 11 : i64} {
  func.func @_embedding_onehot_kernel(%arg0: i32, %arg1: memref<16x1xi32, #tpu.memory_space<vmem>>, %arg2: memref<64x128xf32, #tpu.memory_space<vmem>>, %arg3: memref<16x128xf32, #tpu.memory_space<vmem>>) attributes {dimension_semantics = [#tpu.dimension_semantics<parallel>], iteration_bounds = array<i64: 1>, scalar_prefetch = 0 : i64, scratch_operands = 0 : i64, tpu.core_type = #tpu.core_type<tc>, window_params = [{transform_indices = @transform_0, window_bounds = array<i64: 16, 1>}, {pipeline_mode = #tpu.pipeline_mode<synchronous>, transform_indices = @transform_1, window_bounds = array<i64: 64, 128>}, {transform_indices = @transform_2, window_bounds = array<i64: 16, 128>}]} {
    %c0 = arith.constant 0 : index
    %c0_0 = arith.constant 0 : index
    %0 = vector.load %arg1[%c0, %c0_0] : memref<16x1xi32, #tpu.memory_space<vmem>>, vector<16x1xi32>
    %c0_i32 = arith.constant 0 : i32
    %c63_i32 = arith.constant 63 : i32
    %1 = vector.broadcast %c0_i32 : i32 to vector<16x1xi32>
    %2 = arith.maxsi %1, %0 : vector<16x1xi32>
    %3 = vector.broadcast %c63_i32 : i32 to vector<16x1xi32>
    %4 = arith.minsi %3, %2 : vector<16x1xi32>
    %5 = tpu.iota {dimensions = array<i32: 1>} : vector<16x64xi32>
    %6 = vector.broadcast %4 : vector<16x1xi32> to vector<16x64xi32>
    %7 = arith.cmpi eq, %5, %6 : vector<16x64xi32>
    %8 = arith.extui %7 : vector<16x64xi1> to vector<16x64xi32>
    %9 = arith.sitofp %8 : vector<16x64xi32> to vector<16x64xf32>
    %c0_1 = arith.constant 0 : index
    %c0_2 = arith.constant 0 : index
    %10 = vector.load %arg2[%c0_1, %c0_2] : memref<64x128xf32, #tpu.memory_space<vmem>>, vector<64x128xf32>
    %cst = arith.constant dense<0.000000e+00> : vector<16x128xf32>
    %11 = tpu.matmul %9, %10, %cst {dimension_numbers = #tpu.dot_dimension_numbers<[1], [0], [0], [1], [0, 0, 1, 1], [], []>} : vector<16x64xf32>, vector<64x128xf32>, vector<16x128xf32> -> vector<16x128xf32>
    %c0_3 = arith.constant 0 : index
    %c0_4 = arith.constant 0 : index
    %12 = vector.load %arg3[%c0_3, %c0_4] : memref<16x128xf32, #tpu.memory_space<vmem>>, vector<16x128xf32>
    tpu.vector_store %arg3[%c0_3, %c0_4], %11 {strides = array<i32>} : memref<16x128xf32, #tpu.memory_space<vmem>>, vector<16x128xf32>,
    return
  }
  func.func @transform_0(%arg0: i32) -> (i32, i32) {
    %c0_i32 = arith.constant 0 : i32
    %c0_i32_0 = arith.constant 0 : i32
    return %arg0, %c0_i32 : i32, i32
  }
  func.func @transform_1(%arg0: i32) -> (i32, i32) {
    %c0_i32 = arith.constant 0 : i32
    %c0_i32_0 = arith.constant 0 : i32
    %c0_i32_1 = arith.constant 0 : i32
    return %c0_i32, %c0_i32_0 : i32, i32
  }
  func.func @transform_2(%arg0: i32) -> (i32, i32) {
    %c0_i32 = arith.constant 0 : i32
    %c0_i32_0 = arith.constant 0 : i32
    return %arg0, %c0_i32 : i32, i32
  }
}

</mosaic_0001>

<llo_original>
// kernel: tpu_custom_call.1
$region0: #{tpu_custom_call.1}
  #allocation0 [shape = 'u32[]', space=smem, size = 0x4, offset = 0x4, fixed_abs, tag = 'smem constant byte address 0x4 - core index']
  #allocation1 [shape = 'u32[72,128]{1,0:T(1,128)}', space=vmem, size = 0x9000, scoped, tag = 'internal scratch']
  %s0 = inlined_call_operand.vmem [shape: s32[16,1], index: 0, kind: input, shape index: {}]
  %s1 = inlined_call_operand.hbm [shape: f32[64,128], index: 1, kind: input, shape index: {}]
  %s2 = inlined_call_operand.hbm [shape: f32[16,128], index: 2, kind: output, shape index: {}]
  %s3 = sld [smem:[#allocation0]]
  $region22: #{tpu_custom_call.1} parent=0
    _
  %s5 = ssub.s32 1, %s3
  %s6 = scalar_select 0, %s5, %s3
  $region1: #{tpu_custom_call.1} parent=0
    #allocation2 [shape = 'u8[32768]{0}', space=vmem, size = 0x8000, scoped, tag = 'input window, operand 1, single buffered']
    #allocation3 [shape = 's32[1]{0}', space=sflag, size = 0x4, scoped, tag = 'scoped memory for tpu_custom_call.1']
    #allocation4 [shape = 's32[1]{0}', space=sflag, size = 0x4, scoped, tag = 'scoped memory for tpu_custom_call.1']
    #allocation5 [shape = 'u8[8192]{0}', space=vmem, size = 0x2000, scoped, tag = 'output window, operand 0, single buffered']
    %7 = vsyncpa [#allocation3], 0
    %8 = vsyncpa [#allocation4], 0
    // Predicated region
    $region2: #{tpu_custom_call.1} parent=1 // pred_check
      _
    $region3: #{tpu_custom_call.1} parent=1 // pred_check_branch
      %10 = sbr.rel (0) target = $region5
    $region4: #{tpu_custom_call.1} parent=1 // pred_region
      _
    $region5: #{tpu_custom_call.1} parent=1 // pred_fallthru
      _
    // Predicated region
    $region6: #{tpu_custom_call.1} parent=1 // pred_check
      _
    $region7: #{tpu_custom_call.1} parent=1 // pred_check_branch
      %12 = sbr.rel (0) target = $region9
    $region8: #{tpu_custom_call.1} parent=1 // pred_region
      %14 = vsyncadd [#allocation3], 0
      %s15 = sshll.u32 %s1, 4
      %s16 = int_to_ptr.hbm [resolvable:$true] %s15
      %s17 = sshll.u32 [#allocation2], 4
      %s18 = int_to_ptr.vmem [resolvable:$true] %s17
      %23 = dma.hbm_to_vmem [thread:$0]  %s16, 1024, %s18, [#allocation3], 128, 128, 8
    $region9: #{tpu_custom_call.1} parent=1 // pred_fallthru
      _
    // Predicated region
    $region10: #{tpu_custom_call.1} parent=1 // pred_check
      _
    $region11: #{tpu_custom_call.1} parent=1 // pred_check_branch
      %25 = sbr.rel (0) target = $region13
    $region12: #{tpu_custom_call.1} parent=1 // pred_region
      %27 = dma.done [#allocation3], 1024
    $region13: #{tpu_custom_call.1} parent=1 // pred_fallthru
      _
    %v28 = vld [vmem:[%s0] sm:$0xff]
    %v29 = vld [vmem:[%s0 + $0x8] sm:$0xff]
    %vm30 = vcmp.gt.s32.totalorder %v28, 0
    %v31 = vsel %vm30, %v28, 0
    %vm32 = vcmp.gt.s32.totalorder %v29, 0
    %v33 = vsel %vm32, %v29, 0
    %vm34 = vcmp.lt.s32.totalorder %v31, 63
    %v35 = vsel %vm34, %v31, 63
    %vm36 = vcmp.lt.s32.totalorder %v33, 63
    %v37 = vsel %vm36, %v33, 63
    %v38 = vlaneseq
    %v39 = vand.u32 %v38, 127
    %40 = vset.pattern.permute.xlu0 0
    %41 = vperm.xlu0 %40, %v35
    %v42 = vpop.permute.xlu0 %41
    %43 = vset.pattern.permute.xlu0 0
    %44 = vperm.xlu0 %43, %v37
    %v45 = vpop.permute.xlu0 %44
    %vm46 = vcmp.eq.s32.totalorder %v39, %v42
    %vm47 = vcmp.eq.s32.totalorder %v39, %v45
    %v48 = vsel %vm46, 1, 0
    %v49 = vsel %vm47, 1, 0
    %v50 = vcvt.s32.f32 %v48
    %v51 = vcvt.s32.f32 %v49
    %v52 = vld [vmem:[#allocation2] sm:$0xff]
    %v53 = vld [vmem:[#allocation2 + $0x8] sm:$0xff]
    %v54 = vld [vmem:[#allocation2 + $0x10] sm:$0xff]
    %v55 = vld [vmem:[#allocation2 + $0x18] sm:$0xff]
    %v56 = vld [vmem:[#allocation2 + $0x20] sm:$0xff]
    %v57 = vld [vmem:[#allocation2 + $0x28] sm:$0xff]
    %v58 = vld [vmem:[#allocation2 + $0x30] sm:$0xff]
    %v59 = vld [vmem:[#allocation2 + $0x38] sm:$0xff]
    %vm60 = vcmask 523264
    %v62 = vsel %vm60, %v50, 0
    %v65 = vsel %vm60, %v51, 0
    %67 = vmatpush.msra.mxu0 0.0
    %68 = vmatpush.msra.mxu0 0.0
    %69 = vmatpush.msra.mxu0 0.0
    %70 = vmatpush.msra.mxu0 0.0
    %71 = vmatpush.msra.mxu0 0.0
    %72 = vmatpush.msra.mxu0 0.0
    %73 = vmatpush.msra.mxu0 0.0
    %74 = vmatpush.msra.mxu0 0.0
    %75 = vmatpush.msra.mxu0 %v59
    %76 = vmatpush.msra.mxu0 %v58
    %77 = vmatpush.msra.mxu0 %v57
    %78 = vmatpush.msra.mxu0 %v56
    %79 = vmatpush.msra.mxu0 %v55
    %80 = vmatpush.msra.mxu0 %v54
    %81 = vmatpush.msra.mxu0 %v53
    %82 = vmatpush.msra.mxu0 %v52
    %83 = vmatmul.f32.gmra.mxu0 %v62
    %v84 = vpop.f32.mrf.mxu0
    %v85 = vadd.f32 0.0, %v84
    %86 = vmatmul.f32.gmra.mxu0 %v65
    %v87 = vpop.f32.mrf.mxu0
    %v88 = vadd.f32 0.0, %v87
    %89 = vdwg.mxu0
    %90 = vst [vmem:[#allocation5] sm:$0xff] %v85
    %91 = vst [vmem:[#allocation5 + $0x8] sm:$0xff] %v88
    // Predicated region
    $region14: #{tpu_custom_call.1} parent=1 // pred_check
      _
    $region15: #{tpu_custom_call.1} parent=1 // pred_check_branch
      %93 = sbr.rel (0) target = $region17
    $region16: #{tpu_custom_call.1} parent=1 // pred_region
      %95 = vsyncadd [#allocation4], 0
      %s96 = sshll.u32 [#allocation5], 4
      %s97 = int_to_ptr.vmem [resolvable:$true] %s96
      %s98 = sshll.u32 %s2, 4
      %s99 = int_to_ptr.hbm [resolvable:$true] %s98
      %104 = dma.vmem_to_hbm [thread:$0]  %s97, 256, %s99, [#allocation4], 128, 128, 8
    $region17: #{tpu_custom_call.1} parent=1 // pred_fallthru
      _
    // Predicated region
    $region18: #{tpu_custom_call.1} parent=1 // pred_check
      _
    $region19: #{tpu_custom_call.1} parent=1 // pred_check_branch
      %106 = sbr.rel (0) target = $region21
    $region20: #{tpu_custom_call.1} parent=1 // pred_region
      %108 = dma.done [#allocation4], 256
    $region21: #{tpu_custom_call.1} parent=1 // pred_fallthru
      _
    %109 = vsyncpa [#allocation3], 1
    %110 = vsyncpa [#allocation4], 1

</llo_original>
